<compile_context>
chip_gen: v6e
topology: v6e:2x2x1
jax: 0.10.0
libtpu: 0.0.40
codegen_flags: <defaults>
</compile_context>

<pallas_src>
import jax
import jax.numpy as jnp
from jax.experimental import pallas as pl
from jax.experimental.pallas import tpu as pltpu


def _round_up(x: int, m: int) -> int:
    return ((x + m - 1) // m) * m


def _start_row_gather(table_hbm, ids_ref, base, buf, slot, sem, n, *, unroll):
    """Issue one row DMA per i: buf[slot, i] <- table_hbm[ids_ref[base + i]].

    All `n` copies signal the same DMA semaphore `sem[slot]`; completion is
    observed later with one aggregate wait (see _wait_row_gather).
    """

    def body(i, carry):
        row = ids_ref[base + i]
        pltpu.make_async_copy(
            table_hbm.at[pl.ds(row, 1)],
            buf.at[slot, pl.ds(i, 1)],
            sem.at[slot],
        ).start()
        return carry

    jax.lax.fori_loop(0, n, body, 0, unroll=unroll)


def _wait_row_gather(table_hbm, buf, slot, sem, n):
    """Single aggregate wait for the `n` row copies issued into buf[slot].

    The descriptor is the per-row copies concatenated (same dst slot, n rows
    of the same HBM table), so its byte count equals the sum of the started
    copies exactly.
    """
    pltpu.make_async_copy(
        table_hbm.at[pl.ds(0, n)], buf.at[slot], sem.at[slot]
    ).wait()


def _make_arange_kernel(s_stride, ts, unroll):
    """Default (arange) position path: positions arrive via the pipeline."""

    def kernel(ids_ref, tok_hbm, pos_ref, out_ref, tok_buf, tok_sem):
        # ids_ref : (B * S_pad,) int32 in SMEM (scalar prefetch, flattened)
        # tok_hbm : (vocab, H) token table left in HBM
        # pos_ref : (TS, H) contiguous position chunk (resident across batch)
        # out_ref : (1, TS, H) output tile for (seq chunk s, batch b)
        s = pl.program_id(0)
        b = pl.program_id(1)
        nb = pl.num_programs(1)
        slot = b % 2

        def start(batch, to_slot):
            base = batch * s_stride + s * ts
            _start_row_gather(tok_hbm, ids_ref, base, tok_buf, to_slot,
                              tok_sem, ts, unroll=unroll)

        # Prime the current slot at the start of each chunk's batch loop.
        @pl.when(b == 0)
        def _prime():
            start(b, slot)

        # Prefetch next batch element's rows into the other slot (overlaps
        # with the wait + add + store below).
        @pl.when(b + 1 < nb)
        def _prefetch():
            start(b + 1, (b + 1) % 2)

        _wait_row_gather(tok_hbm, tok_buf, slot, tok_sem, ts)
        out_ref[0] = (tok_buf[slot] + pos_ref[...]).astype(out_ref.dtype)

    return kernel


def _make_gather_kernel(s_stride, ts, unroll):
    """Explicit position_ids path: position rows are gathered as well."""

    def kernel(ids_ref, pos_ids_ref, tok_hbm, pos_hbm, out_ref,
               tok_buf, pos_buf, tok_sem, pos_sem):
        s = pl.program_id(0)
        b = pl.program_id(1)
        nb = pl.num_programs(1)
        slot = b % 2

        def start(batch, to_slot):
            base = batch * s_stride + s * ts
            _start_row_gather(tok_hbm, ids_ref, base, tok_buf, to_slot,
                              tok_sem, ts, unroll=unroll)
            _start_row_gather(pos_hbm, pos_ids_ref, base, pos_buf, to_slot,
                              pos_sem, ts, unroll=unroll)

        @pl.when(b == 0)
        def _prime():
            start(b, slot)

        @pl.when(b + 1 < nb)
        def _prefetch():
            start(b + 1, (b + 1) % 2)

        _wait_row_gather(tok_hbm, tok_buf, slot, tok_sem, ts)
        _wait_row_gather(pos_hbm, pos_buf, slot, pos_sem, ts)
        out_ref[0] = (tok_buf[slot] + pos_buf[slot]).astype(out_ref.dtype)

    return kernel


def clip_text_embeddings(
    input_ids: jax.Array,             # [B, S] int token ids
    token_embedding: jax.Array,       # [vocab, H]
    position_embedding: jax.Array,    # [max_pos, H]
    position_ids: jax.Array | None = None,   # optional [S], [1, S] or [B, S]
    *,
    block_seq: int = 512,
) -> jax.Array:                       # [B, S, H]
    # TODO(synk): the inputs_embeds= path of the PyTorch module (precomputed
    # token embeddings) is not implemented; token lookup is always performed.
    assert block_seq % 8 == 0 and block_seq >= 8
    B, S = input_ids.shape
    vocab, H = token_embedding.shape
    dtype = token_embedding.dtype

    # Sequence tiling: keep S_pad == S (no pad rows, no output slice) whenever
    # the whole sequence fits one tile; only very long sequences are padded to
    # a multiple of block_seq.
    if S <= block_seq:
        TS, S_pad = S, S
    else:
        TS = block_seq
        S_pad = _round_up(S, TS)
    n_sblk = S_pad // TS

    # v7x has 2 TensorCores: if the batch axis is trivially 1 and the whole
    # sequence collapsed to a single tile, split it into 2 chunks when that
    # costs no padding, so the 'parallel' chunk axis feeds both cores.
    if B == 1 and n_sblk == 1 and S >= 16 and S % 16 == 0:
        TS = S // 2
        n_sblk = 2

    # Required by the aggregate-wait descriptor (covers the first TS rows of
    # the table purely for its byte count).
    assert vocab >= TS, "token table must have at least TS rows"

    ids = input_ids.astype(jnp.int32)
    if S_pad != S:
        ids = jnp.pad(ids, ((0, 0), (0, S_pad - S)))   # pad with valid id 0
    ids_flat = ids.reshape(-1)   # 1D SMEM array: avoids 2D SMEM padding

    itemsize = jnp.dtype(dtype).itemsize
    compiler_params = pltpu.CompilerParams(
        dimension_semantics=("parallel", "arbitrary"),
    )
    out_shape = jax.ShapeDtypeStruct((B, S_pad, H), dtype)
    unroll = True if TS <= 128 else 8

    if position_ids is None:
        # Default arange positions: contiguous rows -> sliced BlockSpec whose
        # block index depends only on the outer (chunk) axis, so the chunk
        # stays resident across the inner batch loop.
        max_pos = position_embedding.shape[0]
        pos_table = position_embedding.astype(dtype)
        if S_pad > max_pos:
            pos_table = jnp.pad(pos_table, ((0, S_pad - max_pos), (0, 0)))
        else:
            pos_table = pos_table[:S_pad]
        cost = pl.CostEstimate(
            flops=B * S_pad * H,
            transcendentals=0,
            bytes_accessed=(2 * B * S_pad * H + S_pad * H) * itemsize
            + B * S_pad * 4,
        )
        grid_spec = pltpu.PrefetchScalarGridSpec(
            num_scalar_prefetch=1,        # flattened input_ids -> SMEM
            grid=(n_sblk, B),
            in_specs=[
                pl.BlockSpec(memory_space=pl.ANY),                 # token table (HBM)
                pl.BlockSpec((TS, H), lambda s, b, ids: (s, 0)),   # position chunk
            ],
            out_specs=pl.BlockSpec((1, TS, H), lambda s, b, ids: (b, s, 0)),
            scratch_shapes=[
                pltpu.VMEM((2, TS, H), dtype),       # double-buffered gather
                pltpu.SemaphoreType.DMA((2,)),       # one sem per slot
            ],
        )
        out = pl.pallas_call(
            _make_arange_kernel(S_pad, TS, unroll),
            out_shape=out_shape,
            grid_spec=grid_spec,
            compiler_params=compiler_params,
            cost_estimate=cost,
        )(ids_flat, token_embedding, pos_table)
    else:
        pos_ids = jnp.asarray(position_ids, jnp.int32)
        if pos_ids.ndim == 1:
            pos_ids = pos_ids[None, :]
        pos_ids = jnp.broadcast_to(pos_ids, (B, S))
        if S_pad != S:
            pos_ids = jnp.pad(pos_ids, ((0, 0), (0, S_pad - S)))
        pos_ids_flat = pos_ids.reshape(-1)
        pos_table = position_embedding.astype(dtype)
        assert pos_table.shape[0] >= TS, (
            "position table must have at least TS rows")
        cost = pl.CostEstimate(
            flops=B * S_pad * H,
            transcendentals=0,
            bytes_accessed=3 * B * S_pad * H * itemsize + 2 * B * S_pad * 4,
        )
        grid_spec = pltpu.PrefetchScalarGridSpec(
            num_scalar_prefetch=2,        # input_ids, position_ids -> SMEM
            grid=(n_sblk, B),
            in_specs=[
                pl.BlockSpec(memory_space=pl.ANY),   # token table (HBM)
                pl.BlockSpec(memory_space=pl.ANY),   # position table (HBM)
            ],
            out_specs=pl.BlockSpec(
                (1, TS, H), lambda s, b, ids, pids: (b, s, 0)
            ),
            scratch_shapes=[
                pltpu.VMEM((2, TS, H), dtype),
                pltpu.VMEM((2, TS, H), dtype),
                pltpu.SemaphoreType.DMA((2,)),
                pltpu.SemaphoreType.DMA((2,)),
            ],
        )
        out = pl.pallas_call(
            _make_gather_kernel(S_pad, TS, unroll),
            out_shape=out_shape,
            grid_spec=grid_spec,
            compiler_params=compiler_params,
            cost_estimate=cost,
        )(ids_flat, pos_ids_flat, token_embedding, pos_table)

    # Only the (rare) long-sequence path pads; common case returns directly.
    return out[:, :S, :] if S_pad != S else out


if __name__ == "__main__":
    batch = 2
    seq = 8
    vocab_size = 64
    max_position_embeddings = 16
    hidden = 128

    key = jax.random.PRNGKey(0)
    k_tok, k_pos, k_ids = jax.random.split(key, 3)

    token_embedding = jax.random.normal(k_tok, (vocab_size, hidden), jnp.float32)
    position_embedding = jax.random.normal(
        k_pos, (max_position_embeddings, hidden), jnp.float32
    )
    input_ids = jax.random.randint(k_ids, (batch, seq), 0, vocab_size, jnp.int32)

    # 1) Default (arange position_ids) path, S a multiple of 8.
    out = clip_text_embeddings(input_ids, token_embedding, position_embedding)
    out = jax.block_until_ready(out)
    ref = token_embedding[input_ids] + position_embedding[:seq][None, :, :]
    assert out.shape == (batch, seq, hidden)
    assert out.dtype == jnp.float32
    assert jnp.allclose(out, ref, atol=1e-6, rtol=1e-6)

    # 2) Explicit position_ids path, non-multiple-of-8 sequence (13) with no
    #    padding (single full-sequence tile).
    seq2 = 13
    k_ids2, k_pids = jax.random.split(k_ids)
    input_ids2 = jax.random.randint(k_ids2, (batch, seq2), 0, vocab_size, jnp.int32)
    position_ids2 = jax.random.randint(
        k_pids, (batch, seq2), 0, max_position_embeddings, jnp.int32
    )
    out2 = clip_text_embeddings(
        input_ids2, token_embedding, position_embedding, position_ids2
    )
    out2 = jax.block_until_ready(out2)
    ref2 = token_embedding[input_ids2] + position_embedding[position_ids2]
    assert out2.shape == (batch, seq2, hidden)
    assert jnp.allclose(out2, ref2, atol=1e-6, rtol=1e-6)

    # 3) B == 1: exercises the 2-chunk split (keeps both v7x TCs busy).
    seq3 = 16
    k_ids3, _ = jax.random.split(k_ids2)
    input_ids3 = jax.random.randint(k_ids3, (1, seq3), 0, vocab_size, jnp.int32)
    out3 = jax.block_until_ready(
        clip_text_embeddings(input_ids3, token_embedding, position_embedding)
    )
    ref3 = token_embedding[input_ids3] + position_embedding[:seq3][None, :, :]
    assert jnp.allclose(out3, ref3, atol=1e-6, rtol=1e-6)

    # 4) Long-sequence tiling path (S > block_seq): padding + final slice.
    out4 = jax.block_until_ready(
        clip_text_embeddings(
            input_ids2, token_embedding, position_embedding, block_seq=8
        )
    )
    ref4 = token_embedding[input_ids2] + position_embedding[:seq2][None, :, :]
    assert jnp.allclose(out4, ref4, atol=1e-6, rtol=1e-6)

    print("KERNEL_OK")
</pallas_src>

<mosaic_0001>
module attributes {stable_mosaic.version = 11 : i64} {
  func.func @kernel(%arg0: i32, %arg1: i32, %arg2: memref<16xi32, #tpu.memory_space<smem>>, %arg3: memref<64x128xf32, #tpu.memory_space<any>>, %arg4: memref<8x128xf32, #tpu.memory_space<vmem>>, %arg5: memref<1x8x128xf32, #tpu.memory_space<vmem>>, %arg6: memref<2x8x128xf32, #tpu.memory_space<vmem>>, %arg7: memref<2x!tpu.dma_semaphore, #tpu.memory_space<semaphore_mem>>) attributes {dimension_semantics = [#tpu.dimension_semantics<parallel>, #tpu.dimension_semantics<arbitrary>], iteration_bounds = array<i64: 1, 2>, scalar_prefetch = 1 : i64, scratch_operands = 2 : i64, tpu.core_type = #tpu.core_type<tc>, window_params = [{}, {transform_indices = @transform_1, window_bounds = array<i64: 8, 128>}, {transform_indices = @transform_2, window_bounds = array<i64: 1, 8, 128>}]} {
    %c2_i32 = arith.constant 2 : i32
    %c0_i32 = arith.constant 0 : i32
    %0 = arith.cmpi eq, %c2_i32, %c0_i32 : i32
    %c1_i32 = arith.constant 1 : i32
    %1 = arith.select %0, %c1_i32, %c2_i32 : i32
    %2 = arith.remsi %arg1, %1 : i32
    %c0_i32_0 = arith.constant 0 : i32
    %3 = arith.cmpi ne, %2, %c0_i32_0 : i32
    %c0_i32_1 = arith.constant 0 : i32
    %4 = arith.cmpi slt, %2, %c0_i32_1 : i32
    %c0_i32_2 = arith.constant 0 : i32
    %5 = arith.cmpi slt, %1, %c0_i32_2 : i32
    %6 = arith.xori %4, %5 : i1
    %7 = arith.andi %6, %3 : i1
    %8 = arith.addi %2, %1 : i32
    %9 = arith.select %7, %8, %2 : i32
    %c0_i32_3 = arith.constant 0 : i32
    %10 = arith.cmpi eq, %arg1, %c0_i32_3 : i32
    %11 = arith.extui %10 : i1 to i32
    %c0_i32_4 = arith.constant 0 : i32
    %12 = arith.cmpi ne, %11, %c0_i32_4 : i32
    scf.if %12 {
      %c8_i32 = arith.constant 8 : i32
      %30 = arith.muli %arg1, %c8_i32 : i32
      %c8_i32_18 = arith.constant 8 : i32
      %31 = arith.muli %arg0, %c8_i32_18 : i32
      %32 = arith.addi %30, %31 : i32
      %c0_i32_19 = arith.constant 0 : i32
      %33 = arith.addi %32, %c0_i32_19 : i32
      %34 = arith.index_cast %33 : i32 to index
      %35 = memref.load %arg2[%34] : memref<16xi32, #tpu.memory_space<smem>>
      %c0_i32_20 = arith.constant 0 : i32
      %36 = tpu.memref_slice %arg3[%35, %c0_i32_20] : memref<64x128xf32, #tpu.memory_space<any>> -> memref<1x128xf32, #tpu.memory_space<any>>
      %c0_i32_21 = arith.constant 0 : i32
      %37 = tpu.memref_slice %arg6[%9, %c0_i32_19, %c0_i32_21] : memref<2x8x128xf32, #tpu.memory_space<vmem>> -> memref<1x1x128xf32, #tpu.memory_space<vmem>>
      %38 = tpu.memref_squeeze %37 : memref<1x1x128xf32, #tpu.memory_space<vmem>> -> memref<1x128xf32, #tpu.memory_space<vmem>>
      %39 = tpu.memref_slice %arg7[%9] : memref<2x!tpu.dma_semaphore, #tpu.memory_space<semaphore_mem>> -> memref<1x!tpu.dma_semaphore, #tpu.memory_space<semaphore_mem>>
      %40 = tpu.memref_squeeze %39 : memref<1x!tpu.dma_semaphore, #tpu.memory_space<semaphore_mem>> -> memref<!tpu.dma_semaphore, #tpu.memory_space<semaphore_mem>>
      tpu.enqueue_dma source(%36 : memref<1x128xf32, #tpu.memory_space<any>>) target(%38 : memref<1x128xf32, #tpu.memory_space<vmem>>) target_semaphore(%40 : memref<!tpu.dma_semaphore, #tpu.memory_space<semaphore_mem>>)
      %c1_i32_22 = arith.constant 1 : i32
      %41 = arith.addi %32, %c1_i32_22 : i32
      %42 = arith.index_cast %41 : i32 to index
      %43 = memref.load %arg2[%42] : memref<16xi32, #tpu.memory_space<smem>>
      %c0_i32_23 = arith.constant 0 : i32
      %44 = tpu.memref_slice %arg3[%43, %c0_i32_23] : memref<64x128xf32, #tpu.memory_space<any>> -> memref<1x128xf32, #tpu.memory_space<any>>
      %c0_i32_24 = arith.constant 0 : i32
      %45 = tpu.memref_slice %arg6[%9, %c1_i32_22, %c0_i32_24] : memref<2x8x128xf32, #tpu.memory_space<vmem>> -> memref<1x1x128xf32, #tpu.memory_space<vmem>>
      %46 = tpu.memref_squeeze %45 : memref<1x1x128xf32, #tpu.memory_space<vmem>> -> memref<1x128xf32, #tpu.memory_space<vmem>>
      %47 = tpu.memref_slice %arg7[%9] : memref<2x!tpu.dma_semaphore, #tpu.memory_space<semaphore_mem>> -> memref<1x!tpu.dma_semaphore, #tpu.memory_space<semaphore_mem>>
      %48 = tpu.memref_squeeze %47 : memref<1x!tpu.dma_semaphore, #tpu.memory_space<semaphore_mem>> -> memref<!tpu.dma_semaphore, #tpu.memory_space<semaphore_mem>>
      tpu.enqueue_dma source(%44 : memref<1x128xf32, #tpu.memory_space<any>>) target(%46 : memref<1x128xf32, #tpu.memory_space<vmem>>) target_semaphore(%48 : memref<!tpu.dma_semaphore, #tpu.memory_space<semaphore_mem>>)
      %c2_i32_25 = arith.constant 2 : i32
      %49 = arith.addi %32, %c2_i32_25 : i32
      %50 = arith.index_cast %49 : i32 to index
      %51 = memref.load %arg2[%50] : memref<16xi32, #tpu.memory_space<smem>>
      %c0_i32_26 = arith.constant 0 : i32
      %52 = tpu.memref_slice %arg3[%51, %c0_i32_26] : memref<64x128xf32, #tpu.memory_space<any>> -> memref<1x128xf32, #tpu.memory_space<any>>
      %c0_i32_27 = arith.constant 0 : i32
      %53 = tpu.memref_slice %arg6[%9, %c2_i32_25, %c0_i32_27] : memref<2x8x128xf32, #tpu.memory_space<vmem>> -> memref<1x1x128xf32, #tpu.memory_space<vmem>>
      %54 = tpu.memref_squeeze %53 : memref<1x1x128xf32, #tpu.memory_space<vmem>> -> memref<1x128xf32, #tpu.memory_space<vmem>>
      %55 = tpu.memref_slice %arg7[%9] : memref<2x!tpu.dma_semaphore, #tpu.memory_space<semaphore_mem>> -> memref<1x!tpu.dma_semaphore, #tpu.memory_space<semaphore_mem>>
      %56 = tpu.memref_squeeze %55 : memref<1x!tpu.dma_semaphore, #tpu.memory_space<semaphore_mem>> -> memref<!tpu.dma_semaphore, #tpu.memory_space<semaphore_mem>>
      tpu.enqueue_dma source(%52 : memref<1x128xf32, #tpu.memory_space<any>>) target(%54 : memref<1x128xf32, #tpu.memory_space<vmem>>) target_semaphore(%56 : memref<!tpu.dma_semaphore, #tpu.memory_space<semaphore_mem>>)
      %c3_i32 = arith.constant 3 : i32
      %57 = arith.addi %32, %c3_i32 : i32
      %58 = arith.index_cast %57 : i32 to index
      %59 = memref.load %arg2[%58] : memref<16xi32, #tpu.memory_space<smem>>
      %c0_i32_28 = arith.constant 0 : i32
      %60 = tpu.memref_slice %arg3[%59, %c0_i32_28] : memref<64x128xf32, #tpu.memory_space<any>> -> memref<1x128xf32, #tpu.memory_space<any>>
      %c0_i32_29 = arith.constant 0 : i32
      %61 = tpu.memref_slice %arg6[%9, %c3_i32, %c0_i32_29] : memref<2x8x128xf32, #tpu.memory_space<vmem>> -> memref<1x1x128xf32, #tpu.memory_space<vmem>>
      %62 = tpu.memref_squeeze %61 : memref<1x1x128xf32, #tpu.memory_space<vmem>> -> memref<1x128xf32, #tpu.memory_space<vmem>>
      %63 = tpu.memref_slice %arg7[%9] : memref<2x!tpu.dma_semaphore, #tpu.memory_space<semaphore_mem>> -> memref<1x!tpu.dma_semaphore, #tpu.memory_space<semaphore_mem>>
      %64 = tpu.memref_squeeze %63 : memref<1x!tpu.dma_semaphore, #tpu.memory_space<semaphore_mem>> -> memref<!tpu.dma_semaphore, #tpu.memory_space<semaphore_mem>>
      tpu.enqueue_dma source(%60 : memref<1x128xf32, #tpu.memory_space<any>>) target(%62 : memref<1x128xf32, #tpu.memory_space<vmem>>) target_semaphore(%64 : memref<!tpu.dma_semaphore, #tpu.memory_space<semaphore_mem>>)
      %c4_i32 = arith.constant 4 : i32
      %65 = arith.addi %32, %c4_i32 : i32
      %66 = arith.index_cast %65 : i32 to index
      %67 = memref.load %arg2[%66] : memref<16xi32, #tpu.memory_space<smem>>
      %c0_i32_30 = arith.constant 0 : i32
      %68 = tpu.memref_slice %arg3[%67, %c0_i32_30] : memref<64x128xf32, #tpu.memory_space<any>> -> memref<1x128xf32, #tpu.memory_space<any>>
      %c0_i32_31 = arith.constant 0 : i32
      %69 = tpu.memref_slice %arg6[%9, %c4_i32, %c0_i32_31] : memref<2x8x128xf32, #tpu.memory_space<vmem>> -> memref<1x1x128xf32, #tpu.memory_space<vmem>>
      %70 = tpu.memref_squeeze %69 : memref<1x1x128xf32, #tpu.memory_space<vmem>> -> memref<1x128xf32, #tpu.memory_space<vmem>>
      %71 = tpu.memref_slice %arg7[%9] : memref<2x!tpu.dma_semaphore, #tpu.memory_space<semaphore_mem>> -> memref<1x!tpu.dma_semaphore, #tpu.memory_space<semaphore_mem>>
      %72 = tpu.memref_squeeze %71 : memref<1x!tpu.dma_semaphore, #tpu.memory_space<semaphore_mem>> -> memref<!tpu.dma_semaphore, #tpu.memory_space<semaphore_mem>>
      tpu.enqueue_dma source(%68 : memref<1x128xf32, #tpu.memory_space<any>>) target(%70 : memref<1x128xf32, #tpu.memory_space<vmem>>) target_semaphore(%72 : memref<!tpu.dma_semaphore, #tpu.memory_space<semaphore_mem>>)
      %c5_i32 = arith.constant 5 : i32
      %73 = arith.addi %32, %c5_i32 : i32
      %74 = arith.index_cast %73 : i32 to index
      %75 = memref.load %arg2[%74] : memref<16xi32, #tpu.memory_space<smem>>
      %c0_i32_32 = arith.constant 0 : i32
      %76 = tpu.memref_slice %arg3[%75, %c0_i32_32] : memref<64x128xf32, #tpu.memory_space<any>> -> memref<1x128xf32, #tpu.memory_space<any>>
      %c0_i32_33 = arith.constant 0 : i32
      %77 = tpu.memref_slice %arg6[%9, %c5_i32, %c0_i32_33] : memref<2x8x128xf32, #tpu.memory_space<vmem>> -> memref<1x1x128xf32, #tpu.memory_space<vmem>>
      %78 = tpu.memref_squeeze %77 : memref<1x1x128xf32, #tpu.memory_space<vmem>> -> memref<1x128xf32, #tpu.memory_space<vmem>>
      %79 = tpu.memref_slice %arg7[%9] : memref<2x!tpu.dma_semaphore, #tpu.memory_space<semaphore_mem>> -> memref<1x!tpu.dma_semaphore, #tpu.memory_space<semaphore_mem>>
      %80 = tpu.memref_squeeze %79 : memref<1x!tpu.dma_semaphore, #tpu.memory_space<semaphore_mem>> -> memref<!tpu.dma_semaphore, #tpu.memory_space<semaphore_mem>>
      tpu.enqueue_dma source(%76 : memref<1x128xf32, #tpu.memory_space<any>>) target(%78 : memref<1x128xf32, #tpu.memory_space<vmem>>) target_semaphore(%80 : memref<!tpu.dma_semaphore, #tpu.memory_space<semaphore_mem>>)
      %c6_i32 = arith.constant 6 : i32
      %81 = arith.addi %32, %c6_i32 : i32
      %82 = arith.index_cast %81 : i32 to index
      %83 = memref.load %arg2[%82] : memref<16xi32, #tpu.memory_space<smem>>
      %c0_i32_34 = arith.constant 0 : i32
      %84 = tpu.memref_slice %arg3[%83, %c0_i32_34] : memref<64x128xf32, #tpu.memory_space<any>> -> memref<1x128xf32, #tpu.memory_space<any>>
      %c0_i32_35 = arith.constant 0 : i32
      %85 = tpu.memref_slice %arg6[%9, %c6_i32, %c0_i32_35] : memref<2x8x128xf32, #tpu.memory_space<vmem>> -> memref<1x1x128xf32, #tpu.memory_space<vmem>>
      %86 = tpu.memref_squeeze %85 : memref<1x1x128xf32, #tpu.memory_space<vmem>> -> memref<1x128xf32, #tpu.memory_space<vmem>>
      %87 = tpu.memref_slice %arg7[%9] : memref<2x!tpu.dma_semaphore, #tpu.memory_space<semaphore_mem>> -> memref<1x!tpu.dma_semaphore, #tpu.memory_space<semaphore_mem>>
      %88 = tpu.memref_squeeze %87 : memref<1x!tpu.dma_semaphore, #tpu.memory_space<semaphore_mem>> -> memref<!tpu.dma_semaphore, #tpu.memory_space<semaphore_mem>>
      tpu.enqueue_dma source(%84 : memref<1x128xf32, #tpu.memory_space<any>>) target(%86 : memref<1x128xf32, #tpu.memory_space<vmem>>) target_semaphore(%88 : memref<!tpu.dma_semaphore, #tpu.memory_space<semaphore_mem>>)
      %c7_i32 = arith.constant 7 : i32
      %89 = arith.addi %32, %c7_i32 : i32
      %90 = arith.index_cast %89 : i32 to index
      %91 = memref.load %arg2[%90] : memref<16xi32, #tpu.memory_space<smem>>
      %c0_i32_36 = arith.constant 0 : i32
      %92 = tpu.memref_slice %arg3[%91, %c0_i32_36] : memref<64x128xf32, #tpu.memory_space<any>> -> memref<1x128xf32, #tpu.memory_space<any>>
      %c0_i32_37 = arith.constant 0 : i32
      %93 = tpu.memref_slice %arg6[%9, %c7_i32, %c0_i32_37] : memref<2x8x128xf32, #tpu.memory_space<vmem>> -> memref<1x1x128xf32, #tpu.memory_space<vmem>>
      %94 = tpu.memref_squeeze %93 : memref<1x1x128xf32, #tpu.memory_space<vmem>> -> memref<1x128xf32, #tpu.memory_space<vmem>>
      %95 = tpu.memref_slice %arg7[%9] : memref<2x!tpu.dma_semaphore, #tpu.memory_space<semaphore_mem>> -> memref<1x!tpu.dma_semaphore, #tpu.memory_space<semaphore_mem>>
      %96 = tpu.memref_squeeze %95 : memref<1x!tpu.dma_semaphore, #tpu.memory_space<semaphore_mem>> -> memref<!tpu.dma_semaphore, #tpu.memory_space<semaphore_mem>>
      tpu.enqueue_dma source(%92 : memref<1x128xf32, #tpu.memory_space<any>>) target(%94 : memref<1x128xf32, #tpu.memory_space<vmem>>) target_semaphore(%96 : memref<!tpu.dma_semaphore, #tpu.memory_space<semaphore_mem>>)
      %c8_i32_38 = arith.constant 8 : i32
    } else {
    }
    %c1_i32_5 = arith.constant 1 : i32
    %13 = arith.addi %arg1, %c1_i32_5 : i32
    %c2_i32_6 = arith.constant 2 : i32
    %14 = arith.cmpi slt, %13, %c2_i32_6 : i32
    %15 = arith.extui %14 : i1 to i32
    %c0_i32_7 = arith.constant 0 : i32
    %16 = arith.cmpi ne, %15, %c0_i32_7 : i32
    scf.if %16 {
      %c1_i32_18 = arith.constant 1 : i32
      %30 = arith.addi %arg1, %c1_i32_18 : i32
      %c1_i32_19 = arith.constant 1 : i32
      %31 = arith.addi %arg1, %c1_i32_19 : i32
      %c2_i32_20 = arith.constant 2 : i32
      %c0_i32_21 = arith.constant 0 : i32
      %32 = arith.cmpi eq, %c2_i32_20, %c0_i32_21 : i32
      %c1_i32_22 = arith.constant 1 : i32
      %33 = arith.select %32, %c1_i32_22, %c2_i32_20 : i32
      %34 = arith.remsi %31, %33 : i32
      %c0_i32_23 = arith.constant 0 : i32
      %35 = arith.cmpi ne, %34, %c0_i32_23 : i32
      %c0_i32_24 = arith.constant 0 : i32
      %36 = arith.cmpi slt, %34, %c0_i32_24 : i32
      %c0_i32_25 = arith.constant 0 : i32
      %37 = arith.cmpi slt, %33, %c0_i32_25 : i32
      %38 = arith.xori %36, %37 : i1
      %39 = arith.andi %38, %35 : i1
      %40 = arith.addi %34, %33 : i32
      %41 = arith.select %39, %40, %34 : i32
      %c8_i32 = arith.constant 8 : i32
      %42 = arith.muli %30, %c8_i32 : i32
      %c8_i32_26 = arith.constant 8 : i32
      %43 = arith.muli %arg0, %c8_i32_26 : i32
      %44 = arith.addi %42, %43 : i32
      %c0_i32_27 = arith.constant 0 : i32
      %45 = arith.addi %44, %c0_i32_27 : i32
      %46 = arith.index_cast %45 : i32 to index
      %47 = memref.load %arg2[%46] : memref<16xi32, #tpu.memory_space<smem>>
      %c0_i32_28 = arith.constant 0 : i32
      %48 = tpu.memref_slice %arg3[%47, %c0_i32_28] : memref<64x128xf32, #tpu.memory_space<any>> -> memref<1x128xf32, #tpu.memory_space<any>>
      %c0_i32_29 = arith.constant 0 : i32
      %49 = tpu.memref_slice %arg6[%41, %c0_i32_27, %c0_i32_29] : memref<2x8x128xf32, #tpu.memory_space<vmem>> -> memref<1x1x128xf32, #tpu.memory_space<vmem>>
      %50 = tpu.memref_squeeze %49 : memref<1x1x128xf32, #tpu.memory_space<vmem>> -> memref<1x128xf32, #tpu.memory_space<vmem>>
      %51 = tpu.memref_slice %arg7[%41] : memref<2x!tpu.dma_semaphore, #tpu.memory_space<semaphore_mem>> -> memref<1x!tpu.dma_semaphore, #tpu.memory_space<semaphore_mem>>
      %52 = tpu.memref_squeeze %51 : memref<1x!tpu.dma_semaphore, #tpu.memory_space<semaphore_mem>> -> memref<!tpu.dma_semaphore, #tpu.memory_space<semaphore_mem>>
      tpu.enqueue_dma source(%48 : memref<1x128xf32, #tpu.memory_space<any>>) target(%50 : memref<1x128xf32, #tpu.memory_space<vmem>>) target_semaphore(%52 : memref<!tpu.dma_semaphore, #tpu.memory_space<semaphore_mem>>)
      %c1_i32_30 = arith.constant 1 : i32
      %53 = arith.addi %44, %c1_i32_30 : i32
      %54 = arith.index_cast %53 : i32 to index
      %55 = memref.load %arg2[%54] : memref<16xi32, #tpu.memory_space<smem>>
      %c0_i32_31 = arith.constant 0 : i32
      %56 = tpu.memref_slice %arg3[%55, %c0_i32_31] : memref<64x128xf32, #tpu.memory_space<any>> -> memref<1x128xf32, #tpu.memory_space<any>>
      %c0_i32_32 = arith.constant 0 : i32
      %57 = tpu.memref_slice %arg6[%41, %c1_i32_30, %c0_i32_32] : memref<2x8x128xf32, #tpu.memory_space<vmem>> -> memref<1x1x128xf32, #tpu.memory_space<vmem>>
      %58 = tpu.memref_squeeze %57 : memref<1x1x128xf32, #tpu.memory_space<vmem>> -> memref<1x128xf32, #tpu.memory_space<vmem>>
      %59 = tpu.memref_slice %arg7[%41] : memref<2x!tpu.dma_semaphore, #tpu.memory_space<semaphore_mem>> -> memref<1x!tpu.dma_semaphore, #tpu.memory_space<semaphore_mem>>
      %60 = tpu.memref_squeeze %59 : memref<1x!tpu.dma_semaphore, #tpu.memory_space<semaphore_mem>> -> memref<!tpu.dma_semaphore, #tpu.memory_space<semaphore_mem>>
      tpu.enqueue_dma source(%56 : memref<1x128xf32, #tpu.memory_space<any>>) target(%58 : memref<1x128xf32, #tpu.memory_space<vmem>>) target_semaphore(%60 : memref<!tpu.dma_semaphore, #tpu.memory_space<semaphore_mem>>)
      %c2_i32_33 = arith.constant 2 : i32
      %61 = arith.addi %44, %c2_i32_33 : i32
      %62 = arith.index_cast %61 : i32 to index
      %63 = memref.load %arg2[%62] : memref<16xi32, #tpu.memory_space<smem>>
      %c0_i32_34 = arith.constant 0 : i32
      %64 = tpu.memref_slice %arg3[%63, %c0_i32_34] : memref<64x128xf32, #tpu.memory_space<any>> -> memref<1x128xf32, #tpu.memory_space<any>>
      %c0_i32_35 = arith.constant 0 : i32
      %65 = tpu.memref_slice %arg6[%41, %c2_i32_33, %c0_i32_35] : memref<2x8x128xf32, #tpu.memory_space<vmem>> -> memref<1x1x128xf32, #tpu.memory_space<vmem>>
      %66 = tpu.memref_squeeze %65 : memref<1x1x128xf32, #tpu.memory_space<vmem>> -> memref<1x128xf32, #tpu.memory_space<vmem>>
      %67 = tpu.memref_slice %arg7[%41] : memref<2x!tpu.dma_semaphore, #tpu.memory_space<semaphore_mem>> -> memref<1x!tpu.dma_semaphore, #tpu.memory_space<semaphore_mem>>
      %68 = tpu.memref_squeeze %67 : memref<1x!tpu.dma_semaphore, #tpu.memory_space<semaphore_mem>> -> memref<!tpu.dma_semaphore, #tpu.memory_space<semaphore_mem>>
      tpu.enqueue_dma source(%64 : memref<1x128xf32, #tpu.memory_space<any>>) target(%66 : memref<1x128xf32, #tpu.memory_space<vmem>>) target_semaphore(%68 : memref<!tpu.dma_semaphore, #tpu.memory_space<semaphore_mem>>)
      %c3_i32 = arith.constant 3 : i32
      %69 = arith.addi %44, %c3_i32 : i32
      %70 = arith.index_cast %69 : i32 to index
      %71 = memref.load %arg2[%70] : memref<16xi32, #tpu.memory_space<smem>>
      %c0_i32_36 = arith.constant 0 : i32
      %72 = tpu.memref_slice %arg3[%71, %c0_i32_36] : memref<64x128xf32, #tpu.memory_space<any>> -> memref<1x128xf32, #tpu.memory_space<any>>
      %c0_i32_37 = arith.constant 0 : i32
      %73 = tpu.memref_slice %arg6[%41, %c3_i32, %c0_i32_37] : memref<2x8x128xf32, #tpu.memory_space<vmem>> -> memref<1x1x128xf32, #tpu.memory_space<vmem>>
      %74 = tpu.memref_squeeze %73 : memref<1x1x128xf32, #tpu.memory_space<vmem>> -> memref<1x128xf32, #tpu.memory_space<vmem>>
      %75 = tpu.memref_slice %arg7[%41] : memref<2x!tpu.dma_semaphore, #tpu.memory_space<semaphore_mem>> -> memref<1x!tpu.dma_semaphore, #tpu.memory_space<semaphore_mem>>
      %76 = tpu.memref_squeeze %75 : memref<1x!tpu.dma_semaphore, #tpu.memory_space<semaphore_mem>> -> memref<!tpu.dma_semaphore, #tpu.memory_space<semaphore_mem>>
      tpu.enqueue_dma source(%72 : memref<1x128xf32, #tpu.memory_space<any>>) target(%74 : memref<1x128xf32, #tpu.memory_space<vmem>>) target_semaphore(%76 : memref<!tpu.dma_semaphore, #tpu.memory_space<semaphore_mem>>)
      %c4_i32 = arith.constant 4 : i32
      %77 = arith.addi %44, %c4_i32 : i32
      %78 = arith.index_cast %77 : i32 to index
      %79 = memref.load %arg2[%78] : memref<16xi32, #tpu.memory_space<smem>>
      %c0_i32_38 = arith.constant 0 : i32
      %80 = tpu.memref_slice %arg3[%79, %c0_i32_38] : memref<64x128xf32, #tpu.memory_space<any>> -> memref<1x128xf32, #tpu.memory_space<any>>
      %c0_i32_39 = arith.constant 0 : i32
      %81 = tpu.memref_slice %arg6[%41, %c4_i32, %c0_i32_39] : memref<2x8x128xf32, #tpu.memory_space<vmem>> -> memref<1x1x128xf32, #tpu.memory_space<vmem>>
      %82 = tpu.memref_squeeze %81 : memref<1x1x128xf32, #tpu.memory_space<vmem>> -> memref<1x128xf32, #tpu.memory_space<vmem>>
      %83 = tpu.memref_slice %arg7[%41] : memref<2x!tpu.dma_semaphore, #tpu.memory_space<semaphore_mem>> -> memref<1x!tpu.dma_semaphore, #tpu.memory_space<semaphore_mem>>
      %84 = tpu.memref_squeeze %83 : memref<1x!tpu.dma_semaphore, #tpu.memory_space<semaphore_mem>> -> memref<!tpu.dma_semaphore, #tpu.memory_space<semaphore_mem>>
      tpu.enqueue_dma source(%80 : memref<1x128xf32, #tpu.memory_space<any>>) target(%82 : memref<1x128xf32, #tpu.memory_space<vmem>>) target_semaphore(%84 : memref<!tpu.dma_semaphore, #tpu.memory_space<semaphore_mem>>)
      %c5_i32 = arith.constant 5 : i32
      %85 = arith.addi %44, %c5_i32 : i32
      %86 = arith.index_cast %85 : i32 to index
      %87 = memref.load %arg2[%86] : memref<16xi32, #tpu.memory_space<smem>>
      %c0_i32_40 = arith.constant 0 : i32
      %88 = tpu.memref_slice %arg3[%87, %c0_i32_40] : memref<64x128xf32, #tpu.memory_space<any>> -> memref<1x128xf32, #tpu.memory_space<any>>
      %c0_i32_41 = arith.constant 0 : i32
      %89 = tpu.memref_slice %arg6[%41, %c5_i32, %c0_i32_41] : memref<2x8x128xf32, #tpu.memory_space<vmem>> -> memref<1x1x128xf32, #tpu.memory_space<vmem>>
      %90 = tpu.memref_squeeze %89 : memref<1x1x128xf32, #tpu.memory_space<vmem>> -> memref<1x128xf32, #tpu.memory_space<vmem>>
      %91 = tpu.memref_slice %arg7[%41] : memref<2x!tpu.dma_semaphore, #tpu.memory_space<semaphore_mem>> -> memref<1x!tpu.dma_semaphore, #tpu.memory_space<semaphore_mem>>
      %92 = tpu.memref_squeeze %91 : memref<1x!tpu.dma_semaphore, #tpu.memory_space<semaphore_mem>> -> memref<!tpu.dma_semaphore, #tpu.memory_space<semaphore_mem>>
      tpu.enqueue_dma source(%88 : memref<1x128xf32, #tpu.memory_space<any>>) target(%90 : memref<1x128xf32, #tpu.memory_space<vmem>>) target_semaphore(%92 : memref<!tpu.dma_semaphore, #tpu.memory_space<semaphore_mem>>)
      %c6_i32 = arith.constant 6 : i32
      %93 = arith.addi %44, %c6_i32 : i32
      %94 = arith.index_cast %93 : i32 to index
      %95 = memref.load %arg2[%94] : memref<16xi32, #tpu.memory_space<smem>>
      %c0_i32_42 = arith.constant 0 : i32
      %96 = tpu.memref_slice %arg3[%95, %c0_i32_42] : memref<64x128xf32, #tpu.memory_space<any>> -> memref<1x128xf32, #tpu.memory_space<any>>
      %c0_i32_43 = arith.constant 0 : i32
      %97 = tpu.memref_slice %arg6[%41, %c6_i32, %c0_i32_43] : memref<2x8x128xf32, #tpu.memory_space<vmem>> -> memref<1x1x128xf32, #tpu.memory_space<vmem>>
      %98 = tpu.memref_squeeze %97 : memref<1x1x128xf32, #tpu.memory_space<vmem>> -> memref<1x128xf32, #tpu.memory_space<vmem>>
      %99 = tpu.memref_slice %arg7[%41] : memref<2x!tpu.dma_semaphore, #tpu.memory_space<semaphore_mem>> -> memref<1x!tpu.dma_semaphore, #tpu.memory_space<semaphore_mem>>
      %100 = tpu.memref_squeeze %99 : memref<1x!tpu.dma_semaphore, #tpu.memory_space<semaphore_mem>> -> memref<!tpu.dma_semaphore, #tpu.memory_space<semaphore_mem>>
      tpu.enqueue_dma source(%96 : memref<1x128xf32, #tpu.memory_space<any>>) target(%98 : memref<1x128xf32, #tpu.memory_space<vmem>>) target_semaphore(%100 : memref<!tpu.dma_semaphore, #tpu.memory_space<semaphore_mem>>)
      %c7_i32 = arith.constant 7 : i32
      %101 = arith.addi %44, %c7_i32 : i32
      %102 = arith.index_cast %101 : i32 to index
      %103 = memref.load %arg2[%102] : memref<16xi32, #tpu.memory_space<smem>>
      %c0_i32_44 = arith.constant 0 : i32
      %104 = tpu.memref_slice %arg3[%103, %c0_i32_44] : memref<64x128xf32, #tpu.memory_space<any>> -> memref<1x128xf32, #tpu.memory_space<any>>
      %c0_i32_45 = arith.constant 0 : i32
      %105 = tpu.memref_slice %arg6[%41, %c7_i32, %c0_i32_45] : memref<2x8x128xf32, #tpu.memory_space<vmem>> -> memref<1x1x128xf32, #tpu.memory_space<vmem>>
      %106 = tpu.memref_squeeze %105 : memref<1x1x128xf32, #tpu.memory_space<vmem>> -> memref<1x128xf32, #tpu.memory_space<vmem>>
      %107 = tpu.memref_slice %arg7[%41] : memref<2x!tpu.dma_semaphore, #tpu.memory_space<semaphore_mem>> -> memref<1x!tpu.dma_semaphore, #tpu.memory_space<semaphore_mem>>
      %108 = tpu.memref_squeeze %107 : memref<1x!tpu.dma_semaphore, #tpu.memory_space<semaphore_mem>> -> memref<!tpu.dma_semaphore, #tpu.memory_space<semaphore_mem>>
      tpu.enqueue_dma source(%104 : memref<1x128xf32, #tpu.memory_space<any>>) target(%106 : memref<1x128xf32, #tpu.memory_space<vmem>>) target_semaphore(%108 : memref<!tpu.dma_semaphore, #tpu.memory_space<semaphore_mem>>)
      %c8_i32_46 = arith.constant 8 : i32
    } else {
    }
    %c0_i32_8 = arith.constant 0 : i32
    %c0_i32_9 = arith.constant 0 : i32
    %17 = tpu.memref_slice %arg3[%c0_i32_8, %c0_i32_9] : memref<64x128xf32, #tpu.memory_space<any>> -> memref<8x128xf32, #tpu.memory_space<any>>
    %c0_i32_10 = arith.constant 0 : i32
    %c0_i32_11 = arith.constant 0 : i32
    %18 = tpu.memref_slice %arg6[%9, %c0_i32_10, %c0_i32_11] : memref<2x8x128xf32, #tpu.memory_space<vmem>> -> memref<1x8x128xf32, #tpu.memory_space<vmem>>
    %19 = tpu.memref_squeeze %18 : memref<1x8x128xf32, #tpu.memory_space<vmem>> -> memref<8x128xf32, #tpu.memory_space<vmem>>
    %20 = tpu.memref_slice %arg7[%9] : memref<2x!tpu.dma_semaphore, #tpu.memory_space<semaphore_mem>> -> memref<1x!tpu.dma_semaphore, #tpu.memory_space<semaphore_mem>>
    %21 = tpu.memref_squeeze %20 : memref<1x!tpu.dma_semaphore, #tpu.memory_space<semaphore_mem>> -> memref<!tpu.dma_semaphore, #tpu.memory_space<semaphore_mem>>
    tpu.wait_dma2 semaphore(%21 : memref<!tpu.dma_semaphore, #tpu.memory_space<semaphore_mem>>) src(%17 : memref<8x128xf32, #tpu.memory_space<any>>) dst(%19 : memref<8x128xf32, #tpu.memory_space<vmem>>)
    %22 = arith.index_cast %9 : i32 to index
    %c0 = arith.constant 0 : index
    %c0_12 = arith.constant 0 : index
    %23 = vector.load %arg6[%22, %c0, %c0_12] : memref<2x8x128xf32, #tpu.memory_space<vmem>>, vector<1x8x128xf32>
    %24 = vector.shape_cast %23 : vector<1x8x128xf32> to vector<8x128xf32>
    %c0_13 = arith.constant 0 : index
    %c0_14 = arith.constant 0 : index
    %25 = vector.load %arg4[%c0_13, %c0_14] : memref<8x128xf32, #tpu.memory_space<vmem>>, vector<8x128xf32>
    %26 = arith.addf %24, %25 : vector<8x128xf32>
    %c0_15 = arith.constant 0 : index
    %c0_16 = arith.constant 0 : index
    %c0_17 = arith.constant 0 : index
    %27 = vector.load %arg5[%c0_15, %c0_16, %c0_17] : memref<1x8x128xf32, #tpu.memory_space<vmem>>, vector<1x8x128xf32>
    %28 = vector.shape_cast %27 : vector<1x8x128xf32> to vector<8x128xf32>
    %29 = vector.shape_cast %26 : vector<8x128xf32> to vector<1x8x128xf32>
    tpu.vector_store %arg5[%c0_15, %c0_16, %c0_17], %29 {strides = array<i32>} : memref<1x8x128xf32, #tpu.memory_space<vmem>>, vector<1x8x128xf32>,
    return
  }
  func.func @transform_1(%arg0: i32, %arg1: i32, %arg2: memref<16xi32, #tpu.memory_space<smem>>) -> (i32, i32) {
    %c0_i32 = arith.constant 0 : i32
    %c0_i32_0 = arith.constant 0 : i32
    return %arg0, %c0_i32 : i32, i32
  }
  func.func @transform_2(%arg0: i32, %arg1: i32, %arg2: memref<16xi32, #tpu.memory_space<smem>>) -> (i32, i32, i32) {
    %c0_i32 = arith.constant 0 : i32
    %c0_i32_0 = arith.constant 0 : i32
    return %arg1, %arg0, %c0_i32 : i32, i32, i32
  }
}

</mosaic_0001>

<llo_original>
// kernel: tpu_custom_call.1
$region0: #{tpu_custom_call.1}
  #allocation0 [shape = 'u32[]', space=smem, size = 0x4, offset = 0x4, fixed_abs, tag = 'smem constant byte address 0x4 - core index']
  #allocation1 [shape = 'u32[144,128]{1,0:T(1,128)}', space=vmem, size = 0x12000, scoped, tag = 'internal scratch']
  #allocation2 [shape = 'f32[2,8,128]{2,1,0:T(8,128)}', space=vmem, size = 0x2000, scoped, tag = 'scratch operand']
  #allocation3 [shape = 's32[2]{0}', space=sflag, size = 0x8, scoped, tag = 'scratch operand']
  #allocation4 [shape = 's32[1]{0}', space=sflag, size = 0x4, scoped, tag = 'scoped memory for tpu_custom_call.1']
  #allocation5 [shape = 'u8[512]{0}', space=smem, size = 0x200, scoped, tag = 'prefetched SMEM operand 0']
  #allocation10 [shape = 's32[]', space=sflag, size = 0x4, offset = 0, fixed_abs, tag = 'sflag constant byte address 0x0 - dummy sync flag']
  #allocation11 [shape = 's32[]', space=sflag, size = 0x4, offset = 0, fixed_abs, tag = 'sflag constant byte address 0x0 - dummy sync flag']
  #allocation12 [shape = 'u32[]', space=smem, size = 0x4, offset = 0x44, fixed_abs, tag = 'smem constant byte address 0x44 - assertion arg 0']
  #allocation13 [shape = 'u32[]', space=smem, size = 0x4, offset = 0x48, fixed_abs, tag = 'smem constant byte address 0x48 - assertion arg 1']
  #allocation14 [shape = 's32[]', space=sflag, size = 0x4, offset = 0, fixed_abs, tag = 'sflag constant byte address 0x0 - dummy sync flag']
  #allocation15 [shape = 's32[]', space=sflag, size = 0x4, offset = 0, fixed_abs, tag = 'sflag constant byte address 0x0 - dummy sync flag']
  #allocation16 [shape = 's32[]', space=sflag, size = 0x4, offset = 0, fixed_abs, tag = 'sflag constant byte address 0x0 - dummy sync flag']
  #allocation17 [shape = 's32[]', space=sflag, size = 0x4, offset = 0, fixed_abs, tag = 'sflag constant byte address 0x0 - dummy sync flag']
  #allocation18 [shape = 's32[]', space=sflag, size = 0x4, offset = 0, fixed_abs, tag = 'sflag constant byte address 0x0 - dummy sync flag']
  #allocation19 [shape = 's32[]', space=sflag, size = 0x4, offset = 0, fixed_abs, tag = 'sflag constant byte address 0x0 - dummy sync flag']
  #allocation20 [shape = 's32[]', space=sflag, size = 0x4, offset = 0, fixed_abs, tag = 'sflag constant byte address 0x0 - dummy sync flag']
  #allocation21 [shape = 's32[]', space=sflag, size = 0x4, offset = 0, fixed_abs, tag = 'sflag constant byte address 0x0 - dummy sync flag']
  #allocation22 [shape = 's32[]', space=sflag, size = 0x4, offset = 0, fixed_abs, tag = 'sflag constant byte address 0x0 - dummy sync flag']
  #allocation23 [shape = 's32[]', space=sflag, size = 0x4, offset = 0, fixed_abs, tag = 'sflag constant byte address 0x0 - dummy sync flag']
  #allocation24 [shape = 's32[]', space=sflag, size = 0x4, offset = 0, fixed_abs, tag = 'sflag constant byte address 0x0 - dummy sync flag']
  #allocation25 [shape = 's32[]', space=sflag, size = 0x4, offset = 0, fixed_abs, tag = 'sflag constant byte address 0x0 - dummy sync flag']
  #allocation26 [shape = 's32[]', space=sflag, size = 0x4, offset = 0, fixed_abs, tag = 'sflag constant byte address 0x0 - dummy sync flag']
  #allocation27 [shape = 's32[]', space=sflag, size = 0x4, offset = 0, fixed_abs, tag = 'sflag constant byte address 0x0 - dummy sync flag']
  #allocation28 [shape = 's32[]', space=sflag, size = 0x4, offset = 0, fixed_abs, tag = 'sflag constant byte address 0x0 - dummy sync flag']
  #allocation29 [shape = 's32[]', space=sflag, size = 0x4, offset = 0, fixed_abs, tag = 'sflag constant byte address 0x0 - dummy sync flag']
  #allocation30 [shape = 's32[]', space=sflag, size = 0x4, offset = 0, fixed_abs, tag = 'sflag constant byte address 0x0 - dummy sync flag']
  #allocation31 [shape = 's32[]', space=sflag, size = 0x4, offset = 0, fixed_abs, tag = 'sflag constant byte address 0x0 - dummy sync flag']
  #allocation32 [shape = 's32[]', space=sflag, size = 0x4, offset = 0, fixed_abs, tag = 'sflag constant byte address 0x0 - dummy sync flag']
  #allocation33 [shape = 's32[]', space=sflag, size = 0x4, offset = 0, fixed_abs, tag = 'sflag constant byte address 0x0 - dummy sync flag']
  #allocation34 [shape = 's32[]', space=sflag, size = 0x4, offset = 0, fixed_abs, tag = 'sflag constant byte address 0x0 - dummy sync flag']
  #allocation35 [shape = 's32[]', space=sflag, size = 0x4, offset = 0, fixed_abs, tag = 'sflag constant byte address 0x0 - dummy sync flag']
  #allocation36 [shape = 's32[]', space=sflag, size = 0x4, offset = 0, fixed_abs, tag = 'sflag constant byte address 0x0 - dummy sync flag']
  #allocation37 [shape = 's32[]', space=sflag, size = 0x4, offset = 0, fixed_abs, tag = 'sflag constant byte address 0x0 - dummy sync flag']
  #allocation38 [shape = 's32[]', space=sflag, size = 0x4, offset = 0, fixed_abs, tag = 'sflag constant byte address 0x0 - dummy sync flag']
  #allocation39 [shape = 's32[]', space=sflag, size = 0x4, offset = 0, fixed_abs, tag = 'sflag constant byte address 0x0 - dummy sync flag']
  #allocation40 [shape = 's32[]', space=sflag, size = 0x4, offset = 0, fixed_abs, tag = 'sflag constant byte address 0x0 - dummy sync flag']
  #allocation41 [shape = 's32[]', space=sflag, size = 0x4, offset = 0, fixed_abs, tag = 'sflag constant byte address 0x0 - dummy sync flag']
  #allocation42 [shape = 's32[]', space=sflag, size = 0x4, offset = 0, fixed_abs, tag = 'sflag constant byte address 0x0 - dummy sync flag']
  #allocation43 [shape = 's32[]', space=sflag, size = 0x4, offset = 0, fixed_abs, tag = 'sflag constant byte address 0x0 - dummy sync flag']
  %s0 = inlined_call_operand.hbm [shape: s32[16], index: 0, kind: input, shape index: {}]
  %s1 = inlined_call_operand.hbm [shape: f32[64,128], index: 1, kind: input, shape index: {}]
  %s2 = inlined_call_operand.hbm [shape: f32[8,128], index: 2, kind: input, shape index: {}]
  %s3 = inlined_call_operand.hbm [shape: f32[2,8,128], index: 3, kind: output, shape index: {}]
  %s4 = sld [smem:[#allocation0]]
  $region113: #{tpu_custom_call.1} parent=0
    _
  %s6 = ssub.s32 1, %s4
  %s7 = scalar_select 0, %s6, %s4
  %9 = dma.hbm_to_smem %s0, 16, [#allocation5], [#allocation4]
  %10 = dma.done [#allocation4], 16
  %11 = sfence
  $region1: #{tpu_custom_call.1} parent=0
    #allocation6 [shape = 'u8[4096]{0}', space=vmem, size = 0x1000, scoped, tag = 'input window, operand 2, single buffered']
    #allocation7 [shape = 's32[2]{0}', space=sflag, size = 0x8, scoped, tag = 'scoped memory for tpu_custom_call.1']
    #allocation8 [shape = 's32[2]{0}', space=sflag, size = 0x8, scoped, tag = 'scoped memory for tpu_custom_call.1']
    #allocation9 [shape = 'u8[8192]{0}', space=vmem, size = 0x2000, scoped, tag = 'output window, operand 0']
    %12 = vsyncpa [#allocation7], 0
    %13 = vsyncpa [#allocation8], 0
    %s14 = scalar_lea.sflag [#allocation8], 1
    %15 = vsyncpa %s14, 0
    loop: start=0, step=1, limit=4
    $region2: #{tpu_custom_call.1} parent=1 // loop_pre_header
      _
    $region3: #{tpu_custom_call.1} parent=1 // loop_header
      %s17 = sphi 0, %s21
      %p18 = scmp.ge.s32.totalorder %s17, 4
      %s24 = sphi 0, %s36
      %s25 = sphi 0, %s32
      %s26 = sphi 0, %s24
      %s27 = sphi 0, %s25
      %s28 = sphi 0, %s26
      %s29 = sphi 0, %s27
      %s39 = sphi 0, %s41
      %s42 = sphi 0, %s39
      %s43 = sphi 0, %s42
      %s59 = sphi 0, %s43
      %s67 = sphi 0, %s69
      %s70 = sphi 0, %s67
      %s71 = sphi 0, %s70
      %s87 = sphi 0, %s71
    $region4: #{tpu_custom_call.1} parent=1 // loop_header_branch
      %20 = sbr.rel (%p18) target = $region8
    $region5: #{tpu_custom_call.1} parent=1 // loop_body
      %s22 = ssub.s32 %s17, 1
      %s23 = ssub.s32 %s17, 2
      %s30 = sadd.s32 1, %s25
      %p31 = scmp.ge.s32.totalorder %s30, 2
      %s32 = scalar_select %p31, 0, %s30
      %s33 = sadd.s32 1, %s24
      %s34 = scalar_select %p31, %s33, %s24
      %p35 = scmp.ge.s32.totalorder %s34, 1
      %s36 = scalar_select %p35, 0, %s34
      %s37 = ssub.s32 %s24, %s36
      %p38 = scmp.eq.s32.totalorder %s37, 0
      %s40 = sadd.s32 %s39, 1
      %s41 = scalar_select %p38, %s39, %s40
      %p44 = pneg %p38
      %p45 = scmp.eq.s32.totalorder %s17, 1
      %p46 = por %p44, %p45
      %p47 = scmp.ne.s32.totalorder %s39, %s42
      %p48 = scmp.eq.s32.totalorder %s17, 0
      %p49 = por %p47, %p48
      %p50 = scmp.ne.s32.totalorder %s39, %s42
      %p51 = scmp.eq.s32.totalorder %s22, 1
      %p52 = por %p50, %p51
      %p53 = scmp.ne.s32.totalorder %s42, %s43
      %p54 = scmp.eq.s32.totalorder %s22, 0
      %p55 = por %p53, %p54
      %p56 = scmp.ne.s32.totalorder %s42, %s43
      %p57 = scmp.eq.s32.totalorder %s23, 1
      %p58 = por %p56, %p57
      %p60 = scmp.ne.s32.totalorder %s43, %s59
      %p61 = scmp.eq.s32.totalorder %s23, 0
      %p62 = por %p60, %p61
      %s63 = ssub.s32 %s25, %s32
      %s64 = ssub.s32 %s24, %s36
      %s65 = sor.u32 %s63, %s64
      %p66 = scmp.eq.s32.totalorder %s65, 0
      %s68 = sadd.s32 %s67, 1
      %s69 = scalar_select %p66, %s67, %s68
      %p72 = pneg %p66
      %p73 = scmp.eq.s32.totalorder %s17, 1
      %p74 = por %p72, %p73
      %p75 = scmp.ne.s32.totalorder %s67, %s70
      %p76 = scmp.eq.s32.totalorder %s17, 0
      %p77 = por %p75, %p76
      %p78 = scmp.ne.s32.totalorder %s67, %s70
      %p79 = scmp.eq.s32.totalorder %s22, 1
      %p80 = por %p78, %p79
      %p81 = scmp.ne.s32.totalorder %s70, %s71
      %p82 = scmp.eq.s32.totalorder %s22, 0
      %p83 = por %p81, %p82
      %p84 = scmp.ne.s32.totalorder %s70, %s71
      %p85 = scmp.eq.s32.totalorder %s23, 1
      %p86 = por %p84, %p85
      %p88 = scmp.ne.s32.totalorder %s71, %s87
      %p89 = scmp.eq.s32.totalorder %s23, 0
      %p90 = por %p88, %p89
      %p91 = scmp.le.s32.totalorder 1, %s17
      %p92 = scmp.lt.s32.totalorder %s17, 3
      %p93 = pnand %p91, %p92
      %p94 = pneg %p93
      // Predicated region
      $region9: #{tpu_custom_call.1} parent=5 // pred_check
        _
      $region10: #{tpu_custom_call.1} parent=5 // pred_check_branch
        %96 = sbr.rel (%p93) target = $region12
      $region11: #{tpu_custom_call.1} parent=5 // pred_region
        %s97 = ssub.s32 %s17, 1
        // Predicated region
        $region13: #{tpu_custom_call.1} parent=11 // pred_check
          %p98 = pneg %p55
        $region14: #{tpu_custom_call.1} parent=11 // pred_check_branch
          %100 = sbr.rel (%p98) target = $region16
        $region15: #{tpu_custom_call.1} parent=11 // pred_region
          %s102 = ssub.s32 128, 128
          %103 = vsyncadd [#allocation7], %s102
          %s104 = smul.addr %s26, 128
          %s105 = scalar_lea.hbm %s2, %s104
          %s107 = sshll.u32 [#allocation6], 4
          %s108 = int_to_ptr.vmem [resolvable:$true] %s107
          %110 = dma.hbm_to_vmem [thread:$0]  %s105, 128, %s108, [#allocation7]
        $region16: #{tpu_custom_call.1} parent=11 // pred_fallthru
          _
      $region12: #{tpu_custom_call.1} parent=5 // pred_fallthru
        _
      %p111 = scmp.lt.s32.totalorder %s17, 2
      // Predicated region
      $region17: #{tpu_custom_call.1} parent=5 // pred_check
        %p112 = pneg %p111
      $region18: #{tpu_custom_call.1} parent=5 // pred_check_branch
        %114 = sbr.rel (%p112) target = $region20
      $region19: #{tpu_custom_call.1} parent=5 // pred_region
        _
      $region20: #{tpu_custom_call.1} parent=5 // pred_fallthru
        _
      %p115 = scmp.le.s32.totalorder 1, %s17
      %p116 = scmp.lt.s32.totalorder %s17, 3
      %p117 = pnand %p115, %p116
      %p118 = pneg %p117
      // Predicated region
      $region21: #{tpu_custom_call.1} parent=5 // pred_check
        _
      $region22: #{tpu_custom_call.1} parent=5 // pred_check_branch
        %120 = sbr.rel (%p117) target = $region24
      $region23: #{tpu_custom_call.1} parent=5 // pred_region
        %s121 = ssub.s32 %s17, 1
        // Predicated region
        $region25: #{tpu_custom_call.1} parent=23 // pred_check
          %p122 = pneg %p55
        $region26: #{tpu_custom_call.1} parent=23 // pred_check_branch
          %124 = sbr.rel (%p122) target = $region28
        $region27: #{tpu_custom_call.1} parent=23 // pred_region
          %125 = dma.done [#allocation7], 128
        $region28: #{tpu_custom_call.1} parent=23 // pred_fallthru
          _
        %p126 = pneg %p55
        %p127 = pneg %p52
        %p128 = pneg %p83
        %p129 = pneg %p80
        %s130 = sand.u32 %s70, 1
        %s131 = scalar_lea.sflag [#allocation8], %s130
        %s132 = sand.u32 %s70, 1
        %s133 = smul.addr %s132, 8
        %s134 = scalar_lea.vmem [#allocation9], %s133
        %p135 = scmp.lt.s32.totalorder %s27, 0
        %s136 = ssub.s32 0, %s27
        %s137 = scalar_select %p135, %s136, %s27
        %s138 = sand.u32 %s137, 1
        %s139 = ssub.s32 0, %s138
        %s140 = scalar_select %p135, %s139, %s138
        %p141 = scmp.ne.s32.totalorder %s140, 0
        %p142 = scmp.lt.s32.totalorder %s140, 0
        %p143 = pnand %p142, %p141
        %p144 = pneg %p143
        %s145 = sadd.s32 %s140, 2
        %s146 = scalar_select %p144, %s145, %s140
        %p147 = scmp.eq.s32.totalorder %s27, 0
        // Predicated region
        $region29: #{tpu_custom_call.1} parent=23 // pred_check
          %p148 = pneg %p147
        $region30: #{tpu_custom_call.1} parent=23 // pred_check_branch
          %150 = sbr.rel (%p148) target = $region32
        $region31: #{tpu_custom_call.1} parent=23 // pred_region
          %s151 = smul.u32 %s27, 8
          %s152 = smul.u32 %s26, 8
          %s153 = sadd.s32 %s151, %s152
          %s154 = sld [smem:[#allocation5 + %s153]]
          %s155 = smul.addr %s154, 16
          %s156 = scalar_lea.hbm %s1, %s155
          %s157 = smul.u32 %s146, 8
          %s158 = scalar_lea.vmem [#allocation2], %s157
          %s159 = scalar_lea.sflag [#allocation3], %s146
          // Predicated region
          $region33: #{tpu_custom_call.1} parent=31 // pred_check
            _
          $region34: #{tpu_custom_call.1} parent=31 // pred_check_branch
            %161 = sbr.rel target = $region36
          $region35: #{tpu_custom_call.1} parent=31 // pred_region
            %162 = sst [smem:[#allocation12]] [#allocation11]
            %163 = sst [smem:[#allocation13]] [#allocation10]
          $region36: #{tpu_custom_call.1} parent=31 // pred_fallthru
            _
          %165 = shalt.err (0)
          %s167 = sshll.u32 %s158, 4
          %s168 = int_to_ptr.vmem [resolvable:$true] %s167
          %170 = dma.hbm_to_vmem [thread:$0]  %s156, 16, %s168, %s159
          %s171 = sadd.s32 %s153, 1
          %s172 = sld [smem:[#allocation5 + %s171]]
          %s173 = smul.addr %s172, 16
          %s174 = scalar_lea.hbm %s1, %s173
          %s175 = sadd.s32 1, %s157
          %s176 = scalar_lea.vmem [#allocation2], %s175
          // Predicated region
          $region37: #{tpu_custom_call.1} parent=31 // pred_check
            _
          $region38: #{tpu_custom_call.1} parent=31 // pred_check_branch
            %178 = sbr.rel target = $region40
          $region39: #{tpu_custom_call.1} parent=31 // pred_region
            %179 = sst [smem:[#allocation12]] [#allocation15]
            %180 = sst [smem:[#allocation13]] [#allocation14]
          $region40: #{tpu_custom_call.1} parent=31 // pred_fallthru
            _
          %182 = shalt.err (0)
          %s184 = sshll.u32 %s176, 4
          %s185 = int_to_ptr.vmem [resolvable:$true] %s184
          %187 = dma.hbm_to_vmem [thread:$0]  %s174, 16, %s185, %s159
          %s188 = sadd.s32 %s153, 2
          %s189 = sld [smem:[#allocation5 + %s188]]
          %s190 = smul.addr %s189, 16
          %s191 = scalar_lea.hbm %s1, %s190
          %s192 = sadd.s32 2, %s157
          %s193 = scalar_lea.vmem [#allocation2], %s192
          // Predicated region
          $region41: #{tpu_custom_call.1} parent=31 // pred_check
            _
          $region42: #{tpu_custom_call.1} parent=31 // pred_check_branch
            %195 = sbr.rel target = $region44
          $region43: #{tpu_custom_call.1} parent=31 // pred_region
            %196 = sst [smem:[#allocation12]] [#allocation17]
            %197 = sst [smem:[#allocation13]] [#allocation16]
          $region44: #{tpu_custom_call.1} parent=31 // pred_fallthru
            _
          %199 = shalt.err (0)
          %s201 = sshll.u32 %s193, 4
          %s202 = int_to_ptr.vmem [resolvable:$true] %s201
          %204 = dma.hbm_to_vmem [thread:$0]  %s191, 16, %s202, %s159
          %s205 = sadd.s32 %s153, 3
          %s206 = sld [smem:[#allocation5 + %s205]]
          %s207 = smul.addr %s206, 16
          %s208 = scalar_lea.hbm %s1, %s207
          %s209 = sadd.s32 3, %s157
          %s210 = scalar_lea.vmem [#allocation2], %s209
          // Predicated region
          $region45: #{tpu_custom_call.1} parent=31 // pred_check
            _
          $region46: #{tpu_custom_call.1} parent=31 // pred_check_branch
            %212 = sbr.rel target = $region48
          $region47: #{tpu_custom_call.1} parent=31 // pred_region
            %213 = sst [smem:[#allocation12]] [#allocation19]
            %214 = sst [smem:[#allocation13]] [#allocation18]
          $region48: #{tpu_custom_call.1} parent=31 // pred_fallthru
            _
          %216 = shalt.err (0)
          %s218 = sshll.u32 %s210, 4
          %s219 = int_to_ptr.vmem [resolvable:$true] %s218
          %221 = dma.hbm_to_vmem [thread:$0]  %s208, 16, %s219, %s159
          %s222 = sadd.s32 %s153, 4
          %s223 = sld [smem:[#allocation5 + %s222]]
          %s224 = smul.addr %s223, 16
          %s225 = scalar_lea.hbm %s1, %s224
          %s226 = sadd.s32 4, %s157
          %s227 = scalar_lea.vmem [#allocation2], %s226
          // Predicated region
          $region49: #{tpu_custom_call.1} parent=31 // pred_check
            _
          $region50: #{tpu_custom_call.1} parent=31 // pred_check_branch
            %229 = sbr.rel target = $region52
          $region51: #{tpu_custom_call.1} parent=31 // pred_region
            %230 = sst [smem:[#allocation12]] [#allocation21]
            %231 = sst [smem:[#allocation13]] [#allocation20]
          $region52: #{tpu_custom_call.1} parent=31 // pred_fallthru
            _
          %233 = shalt.err (0)
          %s235 = sshll.u32 %s227, 4
          %s236 = int_to_ptr.vmem [resolvable:$true] %s235
          %238 = dma.hbm_to_vmem [thread:$0]  %s225, 16, %s236, %s159
          %s239 = sadd.s32 %s153, 5
          %s240 = sld [smem:[#allocation5 + %s239]]
          %s241 = smul.addr %s240, 16
          %s242 = scalar_lea.hbm %s1, %s241
          %s243 = sadd.s32 5, %s157
          %s244 = scalar_lea.vmem [#allocation2], %s243
          // Predicated region
          $region53: #{tpu_custom_call.1} parent=31 // pred_check
            _
          $region54: #{tpu_custom_call.1} parent=31 // pred_check_branch
            %246 = sbr.rel target = $region56
          $region55: #{tpu_custom_call.1} parent=31 // pred_region
            %247 = sst [smem:[#allocation12]] [#allocation23]
            %248 = sst [smem:[#allocation13]] [#allocation22]
          $region56: #{tpu_custom_call.1} parent=31 // pred_fallthru
            _
          %250 = shalt.err (0)
          %s252 = sshll.u32 %s244, 4
          %s253 = int_to_ptr.vmem [resolvable:$true] %s252
          %255 = dma.hbm_to_vmem [thread:$0]  %s242, 16, %s253, %s159
          %s256 = sadd.s32 %s153, 6
          %s257 = sld [smem:[#allocation5 + %s256]]
          %s258 = smul.addr %s257, 16
          %s259 = scalar_lea.hbm %s1, %s258
          %s260 = sadd.s32 6, %s157
          %s261 = scalar_lea.vmem [#allocation2], %s260
          // Predicated region
          $region57: #{tpu_custom_call.1} parent=31 // pred_check
            _
          $region58: #{tpu_custom_call.1} parent=31 // pred_check_branch
            %263 = sbr.rel target = $region60
          $region59: #{tpu_custom_call.1} parent=31 // pred_region
            %264 = sst [smem:[#allocation12]] [#allocation25]
            %265 = sst [smem:[#allocation13]] [#allocation24]
          $region60: #{tpu_custom_call.1} parent=31 // pred_fallthru
            _
          %267 = shalt.err (0)
          %s269 = sshll.u32 %s261, 4
          %s270 = int_to_ptr.vmem [resolvable:$true] %s269
          %272 = dma.hbm_to_vmem [thread:$0]  %s259, 16, %s270, %s159
          %s273 = sadd.s32 %s153, 7
          %s274 = sld [smem:[#allocation5 + %s273]]
          %s275 = smul.addr %s274, 16
          %s276 = scalar_lea.hbm %s1, %s275
          %s277 = sadd.s32 7, %s157
          %s278 = scalar_lea.vmem [#allocation2], %s277
          // Predicated region
          $region61: #{tpu_custom_call.1} parent=31 // pred_check
            _
          $region62: #{tpu_custom_call.1} parent=31 // pred_check_branch
            %280 = sbr.rel target = $region64
          $region63: #{tpu_custom_call.1} parent=31 // pred_region
            %281 = sst [smem:[#allocation12]] [#allocation27]
            %282 = sst [smem:[#allocation13]] [#allocation26]
          $region64: #{tpu_custom_call.1} parent=31 // pred_fallthru
            _
          %284 = shalt.err (0)
          %s286 = sshll.u32 %s278, 4
          %s287 = int_to_ptr.vmem [resolvable:$true] %s286
          %289 = dma.hbm_to_vmem [thread:$0]  %s276, 16, %s287, %s159
        $region32: #{tpu_custom_call.1} parent=23 // pred_fallthru
          _
        %s290 = sadd.s32 %s27, 1
        %p291 = scmp.lt.s32.totalorder %s290, 2
        // Predicated region
        $region65: #{tpu_custom_call.1} parent=23 // pred_check
          %p292 = pneg %p291
        $region66: #{tpu_custom_call.1} parent=23 // pred_check_branch
          %294 = sbr.rel (%p292) target = $region68
        $region67: #{tpu_custom_call.1} parent=23 // pred_region
          %p295 = scmp.lt.s32.totalorder %s290, 0
          %s296 = ssub.s32 0, %s290
          %s297 = scalar_select %p295, %s296, %s290
          %s298 = sand.u32 %s297, 1
          %s299 = ssub.s32 0, %s298
          %s300 = scalar_select %p295, %s299, %s298
          %p301 = scmp.ne.s32.totalorder %s300, 0
          %p302 = scmp.lt.s32.totalorder %s300, 0
          %p303 = pnand %p302, %p301
          %p304 = pneg %p303
          %s305 = sadd.s32 %s300, 2
          %s306 = scalar_select %p304, %s305, %s300
          %s307 = smul.u32 %s290, 8
          %s308 = smul.u32 %s26, 8
          %s309 = sadd.s32 %s307, %s308
          %s310 = sld [smem:[#allocation5 + %s309]]
          %s311 = smul.addr %s310, 16
          %s312 = scalar_lea.hbm %s1, %s311
          %s313 = smul.u32 %s306, 8
          %s314 = scalar_lea.vmem [#allocation2], %s313
          %s315 = scalar_lea.sflag [#allocation3], %s306
          // Predicated region
          $region69: #{tpu_custom_call.1} parent=67 // pred_check
            _
          $region70: #{tpu_custom_call.1} parent=67 // pred_check_branch
            %317 = sbr.rel target = $region72
          $region71: #{tpu_custom_call.1} parent=67 // pred_region
            %318 = sst [smem:[#allocation12]] [#allocation29]
            %319 = sst [smem:[#allocation13]] [#allocation28]
          $region72: #{tpu_custom_call.1} parent=67 // pred_fallthru
            _
          %321 = shalt.err (0)
          %s323 = sshll.u32 %s314, 4
          %s324 = int_to_ptr.vmem [resolvable:$true] %s323
          %326 = dma.hbm_to_vmem [thread:$0]  %s312, 16, %s324, %s315
          %s327 = sadd.s32 %s309, 1
          %s328 = sld [smem:[#allocation5 + %s327]]
          %s329 = smul.addr %s328, 16
          %s330 = scalar_lea.hbm %s1, %s329
          %s331 = sadd.s32 1, %s313
          %s332 = scalar_lea.vmem [#allocation2], %s331
          // Predicated region
          $region73: #{tpu_custom_call.1} parent=67 // pred_check
            _
          $region74: #{tpu_custom_call.1} parent=67 // pred_check_branch
            %334 = sbr.rel target = $region76
          $region75: #{tpu_custom_call.1} parent=67 // pred_region
            %335 = sst [smem:[#allocation12]] [#allocation31]
            %336 = sst [smem:[#allocation13]] [#allocation30]
          $region76: #{tpu_custom_call.1} parent=67 // pred_fallthru
            _
          %338 = shalt.err (0)
          %s340 = sshll.u32 %s332, 4
          %s341 = int_to_ptr.vmem [resolvable:$true] %s340
          %343 = dma.hbm_to_vmem [thread:$0]  %s330, 16, %s341, %s315
          %s344 = sadd.s32 %s309, 2
          %s345 = sld [smem:[#allocation5 + %s344]]
          %s346 = smul.addr %s345, 16
          %s347 = scalar_lea.hbm %s1, %s346
          %s348 = sadd.s32 2, %s313
          %s349 = scalar_lea.vmem [#allocation2], %s348
          // Predicated region
          $region77: #{tpu_custom_call.1} parent=67 // pred_check
            _
          $region78: #{tpu_custom_call.1} parent=67 // pred_check_branch
            %351 = sbr.rel target = $region80
          $region79: #{tpu_custom_call.1} parent=67 // pred_region
            %352 = sst [smem:[#allocation12]] [#allocation33]
            %353 = sst [smem:[#allocation13]] [#allocation32]
          $region80: #{tpu_custom_call.1} parent=67 // pred_fallthru
            _
          %355 = shalt.err (0)
          %s357 = sshll.u32 %s349, 4
          %s358 = int_to_ptr.vmem [resolvable:$true] %s357
          %360 = dma.hbm_to_vmem [thread:$0]  %s347, 16, %s358, %s315
          %s361 = sadd.s32 %s309, 3
          %s362 = sld [smem:[#allocation5 + %s361]]
          %s363 = smul.addr %s362, 16
          %s364 = scalar_lea.hbm %s1, %s363
          %s365 = sadd.s32 3, %s313
          %s366 = scalar_lea.vmem [#allocation2], %s365
          // Predicated region
          $region81: #{tpu_custom_call.1} parent=67 // pred_check
            _
          $region82: #{tpu_custom_call.1} parent=67 // pred_check_branch
            %368 = sbr.rel target = $region84
          $region83: #{tpu_custom_call.1} parent=67 // pred_region
            %369 = sst [smem:[#allocation12]] [#allocation35]
            %370 = sst [smem:[#allocation13]] [#allocation34]
          $region84: #{tpu_custom_call.1} parent=67 // pred_fallthru
            _
          %372 = shalt.err (0)
          %s374 = sshll.u32 %s366, 4
          %s375 = int_to_ptr.vmem [resolvable:$true] %s374
          %377 = dma.hbm_to_vmem [thread:$0]  %s364, 16, %s375, %s315
          %s378 = sadd.s32 %s309, 4
          %s379 = sld [smem:[#allocation5 + %s378]]
          %s380 = smul.addr %s379, 16
          %s381 = scalar_lea.hbm %s1, %s380
          %s382 = sadd.s32 4, %s313
          %s383 = scalar_lea.vmem [#allocation2], %s382
          // Predicated region
          $region85: #{tpu_custom_call.1} parent=67 // pred_check
            _
          $region86: #{tpu_custom_call.1} parent=67 // pred_check_branch
            %385 = sbr.rel target = $region88
          $region87: #{tpu_custom_call.1} parent=67 // pred_region
            %386 = sst [smem:[#allocation12]] [#allocation37]
            %387 = sst [smem:[#allocation13]] [#allocation36]
          $region88: #{tpu_custom_call.1} parent=67 // pred_fallthru
            _
          %389 = shalt.err (0)
          %s391 = sshll.u32 %s383, 4
          %s392 = int_to_ptr.vmem [resolvable:$true] %s391
          %394 = dma.hbm_to_vmem [thread:$0]  %s381, 16, %s392, %s315
          %s395 = sadd.s32 %s309, 5
          %s396 = sld [smem:[#allocation5 + %s395]]
          %s397 = smul.addr %s396, 16
          %s398 = scalar_lea.hbm %s1, %s397
          %s399 = sadd.s32 5, %s313
          %s400 = scalar_lea.vmem [#allocation2], %s399
          // Predicated region
          $region89: #{tpu_custom_call.1} parent=67 // pred_check
            _
          $region90: #{tpu_custom_call.1} parent=67 // pred_check_branch
            %402 = sbr.rel target = $region92
          $region91: #{tpu_custom_call.1} parent=67 // pred_region
            %403 = sst [smem:[#allocation12]] [#allocation39]
            %404 = sst [smem:[#allocation13]] [#allocation38]
          $region92: #{tpu_custom_call.1} parent=67 // pred_fallthru
            _
          %406 = shalt.err (0)
          %s408 = sshll.u32 %s400, 4
          %s409 = int_to_ptr.vmem [resolvable:$true] %s408
          %411 = dma.hbm_to_vmem [thread:$0]  %s398, 16, %s409, %s315
          %s412 = sadd.s32 %s309, 6
          %s413 = sld [smem:[#allocation5 + %s412]]
          %s414 = smul.addr %s413, 16
          %s415 = scalar_lea.hbm %s1, %s414
          %s416 = sadd.s32 6, %s313
          %s417 = scalar_lea.vmem [#allocation2], %s416
          // Predicated region
          $region93: #{tpu_custom_call.1} parent=67 // pred_check
            _
          $region94: #{tpu_custom_call.1} parent=67 // pred_check_branch
            %419 = sbr.rel target = $region96
          $region95: #{tpu_custom_call.1} parent=67 // pred_region
            %420 = sst [smem:[#allocation12]] [#allocation41]
            %421 = sst [smem:[#allocation13]] [#allocation40]
          $region96: #{tpu_custom_call.1} parent=67 // pred_fallthru
            _
          %423 = shalt.err (0)
          %s425 = sshll.u32 %s417, 4
          %s426 = int_to_ptr.vmem [resolvable:$true] %s425
          %428 = dma.hbm_to_vmem [thread:$0]  %s415, 16, %s426, %s315
          %s429 = sadd.s32 %s309, 7
          %s430 = sld [smem:[#allocation5 + %s429]]
          %s431 = smul.addr %s430, 16
          %s432 = scalar_lea.hbm %s1, %s431
          %s433 = sadd.s32 7, %s313
          %s434 = scalar_lea.vmem [#allocation2], %s433
          // Predicated region
          $region97: #{tpu_custom_call.1} parent=67 // pred_check
            _
          $region98: #{tpu_custom_call.1} parent=67 // pred_check_branch
            %436 = sbr.rel target = $region100
          $region99: #{tpu_custom_call.1} parent=67 // pred_region
            %437 = sst [smem:[#allocation12]] [#allocation43]
            %438 = sst [smem:[#allocation13]] [#allocation42]
          $region100: #{tpu_custom_call.1} parent=67 // pred_fallthru
            _
          %440 = shalt.err (0)
          %s442 = sshll.u32 %s434, 4
          %s443 = int_to_ptr.vmem [resolvable:$true] %s442
          %445 = dma.hbm_to_vmem [thread:$0]  %s432, 16, %s443, %s315
        $region68: #{tpu_custom_call.1} parent=23 // pred_fallthru
          _
        %s446 = smul.u32 %s146, 8
        %s447 = scalar_lea.vmem [#allocation2], %s446
        %s448 = scalar_lea.sflag [#allocation3], %s146
        %s449 = smul.u32 8, 1
        %s450 = sshll.u32 %s449, 4
        %451 = dma.done %s448, %s450
        %v452 = vld [vmem:[%s447] sm:$0xff]
        %v453 = vld [vmem:[#allocation6] sm:$0xff]
        %v454 = vadd.f32 %v452, %v453
        %455 = vst [vmem:[%s134] sm:$0xff] %v454
        %s456 = sand.u32 %s70, 1
        %s457 = scalar_lea.sflag [#allocation8], %s456
        %s458 = sand.u32 %s70, 1
        %s459 = smul.addr %s458, 8
        %s460 = scalar_lea.vmem [#allocation9], %s459
        // Predicated region
        $region101: #{tpu_custom_call.1} parent=23 // pred_check
          %p461 = pneg %p80
        $region102: #{tpu_custom_call.1} parent=23 // pred_check_branch
          %463 = sbr.rel (%p461) target = $region104
        $region103: #{tpu_custom_call.1} parent=23 // pred_region
          %s465 = ssub.s32 128, 128
          %466 = vsyncadd %s457, %s465
          %s467 = sadd.s32 %s26, %s27
          %s468 = smul.addr %s467, 128
          %s469 = scalar_lea.hbm %s3, %s468
          %s471 = sshll.u32 %s460, 4
          %s472 = int_to_ptr.vmem [resolvable:$true] %s471
          %474 = dma.vmem_to_hbm [thread:$0]  %s472, 128, %s469, %s457
        $region104: #{tpu_custom_call.1} parent=23 // pred_fallthru
          _
      $region24: #{tpu_custom_call.1} parent=5 // pred_fallthru
        _
      %p475 = scmp.le.s32.totalorder 2, %s17
      // Predicated region
      $region105: #{tpu_custom_call.1} parent=5 // pred_check
        %p476 = pneg %p475
      $region106: #{tpu_custom_call.1} parent=5 // pred_check_branch
        %478 = sbr.rel (%p476) target = $region108
      $region107: #{tpu_custom_call.1} parent=5 // pred_region
        %s479 = ssub.s32 %s17, 2
        // Predicated region
        $region109: #{tpu_custom_call.1} parent=107 // pred_check
          %p480 = pneg %p86
        $region110: #{tpu_custom_call.1} parent=107 // pred_check_branch
          %482 = sbr.rel (%p480) target = $region112
        $region111: #{tpu_custom_call.1} parent=107 // pred_region
          %s483 = sand.u32 %s71, 1
          %s484 = scalar_lea.sflag [#allocation8], %s483
          %s485 = sand.u32 %s71, 1
          %s486 = smul.addr %s485, 8
          %s487 = scalar_lea.vmem [#allocation9], %s486
          %488 = dma.done %s484, 128
        $region112: #{tpu_custom_call.1} parent=107 // pred_fallthru
          _
      $region108: #{tpu_custom_call.1} parent=5 // pred_fallthru
        _
    $region6: #{tpu_custom_call.1} parent=1 // loop_footer
      %s21 = sadd.s32 1, %s17
    $region7: #{tpu_custom_call.1} parent=1 // loop_footer_branch
      %16 = sbr.rel target = $region3
    $region8: #{tpu_custom_call.1} parent=1 // loop_exit
      _
    %489 = vsyncpa [#allocation7], 1
    %s490 = scalar_lea.sflag [#allocation7], 1
    %491 = vsyncpa %s490, 1
    %492 = vsyncpa [#allocation8], 1
    %s493 = scalar_lea.sflag [#allocation8], 1
    %494 = vsyncpa %s493, 1
  %495 = vsyncmov [#allocation3]
  %s496 = vpop.sfrf %495
  %p497 = scmp.eq.s32.totalorder %s496, 0
  %p498 = pneg %p497
  %500 = shalt.err (%p498)
  %s501 = scalar_lea.sflag [#allocation3], 1
  %502 = vsyncmov %s501
  %s503 = vpop.sfrf %502
  %p504 = scmp.eq.s32.totalorder %s503, 0
  %p505 = pneg %p504
  %507 = shalt.err (%p505)

</llo_original>
